<compile_context>
chip_gen: v5e
topology: v5e:2x2
jax: 0.10.0
libtpu: 0.0.40
codegen_flags: <defaults>
</compile_context>

<pallas_src>
import jax
import jax.numpy as jnp
from jax.experimental import pallas as pl
from jax.experimental.pallas import tpu as pltpu


def _pos_embed_kernel(x_ref, pos_ref, o_ref):
    # x_ref : (TILE_B, S*D) rows for the current batch tile.
    # pos_ref: (1, S*D) positional embedding, resident across the whole grid.
    # Elementwise VPU add; the (1, S*D) operand broadcasts over the row axis.
    o_ref[...] = x_ref[...] + pos_ref[...]


def _choose_tile_b(B: int, row_bytes: int, target_tile_bytes: int) -> int:
    """Largest batch-row tile that roughly fits the per-buffer byte budget.

    Keeps the block's sublane dim either == B (full dim) or a multiple of 8
    so the BlockSpec satisfies the TPU (8, 128) tiling rule.
    """
    max_rows = max(1, target_tile_bytes // max(row_bytes, 1))
    if max_rows >= B or B <= 8:
        return B
    return max(8, (max_rows // 8) * 8)


def positional_embedding_1d(x: jax.Array,
                            pos_embedding: jax.Array,
                            *,
                            target_tile_bytes: int = 2 * 1024 * 1024) -> jax.Array:
    """x: (B, S, D); pos_embedding: (1, S, D) or (S, D). Returns x + pos_embedding."""
    B, S, D = x.shape
    pos = jnp.asarray(pos_embedding, dtype=x.dtype).reshape(1, S * D)
    x2 = x.reshape(B, S * D)  # lane-dense layout: last dim is S*D

    row_bytes = S * D * x.dtype.itemsize
    tile_b = _choose_tile_b(B, row_bytes, target_tile_bytes)
    grid_b = pl.cdiv(B, tile_b)

    # VMEM budget: double-buffered x tile + double-buffered out tile + resident pos.
    tile_bytes = tile_b * row_bytes
    needed = 4 * tile_bytes + row_bytes
    vmem_limit = int(min(max(needed + needed // 4, 32 * 1024 * 1024),
                         48 * 1024 * 1024))

    out2 = pl.pallas_call(
        _pos_embed_kernel,
        out_shape=jax.ShapeDtypeStruct((B, S * D), x.dtype),
        grid=(grid_b,),
        in_specs=[
            # TILE_B batch rows per grid step.
            pl.BlockSpec((tile_b, S * D), lambda b: (b, 0)),
            # Positional embedding: same block every step -> stays VMEM-resident.
            pl.BlockSpec((1, S * D), lambda b: (0, 0)),
        ],
        out_specs=pl.BlockSpec((tile_b, S * D), lambda b: (b, 0)),
        compiler_params=pltpu.CompilerParams(
            dimension_semantics=("parallel",),
            vmem_limit_bytes=vmem_limit,
        ),
    )(x2, pos)

    return out2.reshape(B, S, D)


if __name__ == "__main__":
    key = jax.random.PRNGKey(0)
    kx, kp, kx2 = jax.random.split(key, 3)

    # Small shapes consistent with the module: batch=2, seq_len=8, dim=32.
    B, S, D = 2, 8, 32
    x = jax.random.normal(kx, (B, S, D), dtype=jnp.float32)
    # nn.Parameter(torch.zeros(1, seq_len, dim)) — zeros at init. Use small
    # deterministic non-zero values so the add is actually exercised.
    pos_embedding = 0.01 * jax.random.normal(kp, (1, S, D), dtype=jnp.float32)

    out = positional_embedding_1d(x, pos_embedding)
    out = jax.block_until_ready(out)
    ref = x + pos_embedding
    assert out.shape == (B, S, D)
    assert out.dtype == x.dtype
    assert jnp.allclose(out, ref, atol=1e-6), "mismatch vs reference (small case)"

    # Second check: force multi-step grid / batch tiling path (tile_b=8, grid=2).
    B2 = 16
    x_big = jax.random.normal(kx2, (B2, S, D), dtype=jnp.float32)
    out_big = positional_embedding_1d(x_big, pos_embedding,
                                      target_tile_bytes=8 * 1024)
    out_big = jax.block_until_ready(out_big)
    ref_big = x_big + pos_embedding
    assert jnp.allclose(out_big, ref_big, atol=1e-6), "mismatch vs reference (tiled case)"

    print("KERNEL_OK")
</pallas_src>

<mosaic_0001>
module attributes {stable_mosaic.version = 11 : i64} {
  func.func @_pos_embed_kernel(%arg0: i32, %arg1: memref<2x256xf32, #tpu.memory_space<vmem>>, %arg2: memref<1x256xf32, #tpu.memory_space<vmem>>, %arg3: memref<2x256xf32, #tpu.memory_space<vmem>>) attributes {dimension_semantics = [#tpu.dimension_semantics<parallel>], iteration_bounds = array<i64: 1>, scalar_prefetch = 0 : i64, scratch_operands = 0 : i64, tpu.core_type = #tpu.core_type<tc>, window_params = [{transform_indices = @transform_0, window_bounds = array<i64: 2, 256>}, {pipeline_mode = #tpu.pipeline_mode<synchronous>, transform_indices = @transform_1, window_bounds = array<i64: 1, 256>}, {transform_indices = @transform_2, window_bounds = array<i64: 2, 256>}]} {
    %c0 = arith.constant 0 : index
    %c0_0 = arith.constant 0 : index
    %0 = vector.load %arg1[%c0, %c0_0] : memref<2x256xf32, #tpu.memory_space<vmem>>, vector<2x256xf32>
    %c0_1 = arith.constant 0 : index
    %c0_2 = arith.constant 0 : index
    %1 = vector.load %arg2[%c0_1, %c0_2] : memref<1x256xf32, #tpu.memory_space<vmem>>, vector<1x256xf32>
    %2 = vector.broadcast %1 : vector<1x256xf32> to vector<2x256xf32>
    %3 = arith.addf %0, %2 : vector<2x256xf32>
    %c0_3 = arith.constant 0 : index
    %c0_4 = arith.constant 0 : index
    %4 = vector.load %arg3[%c0_3, %c0_4] : memref<2x256xf32, #tpu.memory_space<vmem>>, vector<2x256xf32>
    tpu.vector_store %arg3[%c0_3, %c0_4], %3 {strides = array<i32>} : memref<2x256xf32, #tpu.memory_space<vmem>>, vector<2x256xf32>,
    return
  }
  func.func @transform_0(%arg0: i32) -> (i32, i32) {
    %c0_i32 = arith.constant 0 : i32
    %c0_i32_0 = arith.constant 0 : i32
    return %arg0, %c0_i32 : i32, i32
  }
  func.func @transform_1(%arg0: i32) -> (i32, i32) {
    %c0_i32 = arith.constant 0 : i32
    %c0_i32_0 = arith.constant 0 : i32
    %c0_i32_1 = arith.constant 0 : i32
    return %c0_i32, %c0_i32_0 : i32, i32
  }
  func.func @transform_2(%arg0: i32) -> (i32, i32) {
    %c0_i32 = arith.constant 0 : i32
    %c0_i32_0 = arith.constant 0 : i32
    return %arg0, %c0_i32 : i32, i32
  }
}

</mosaic_0001>

<llo_original>
// kernel: tpu_custom_call.1
$region0: #{tpu_custom_call.1}
  #allocation0 [shape = 'u32[]', space=smem, size = 0x4, offset = 0x4, fixed_abs, tag = 'smem constant byte address 0x4 - core index']
  #allocation1 [shape = 'u32[72,128]{1,0:T(1,128)}', space=vmem, size = 0x9000, scoped, tag = 'internal scratch']
  %s0 = inlined_call_operand.hbm [shape: f32[2,256], index: 0, kind: input, shape index: {}]
  %s1 = inlined_call_operand.hbm [shape: f32[1,256], index: 1, kind: input, shape index: {}]
  %s2 = inlined_call_operand.hbm [shape: f32[2,256], index: 2, kind: output, shape index: {}]
  %s3 = sld [smem:[#allocation0]]
  $region26: #{tpu_custom_call.1} parent=0
    _
  %s5 = ssub.s32 1, %s3
  %s6 = scalar_select 0, %s5, %s3
  $region1: #{tpu_custom_call.1} parent=0
    #allocation2 [shape = 'u8[2048]{0}', space=vmem, size = 0x800, scoped, tag = 'input window, operand 0, single buffered']
    #allocation3 [shape = 's32[1]{0}', space=sflag, size = 0x4, scoped, tag = 'scoped memory for tpu_custom_call.1']
    #allocation4 [shape = 's32[1]{0}', space=sflag, size = 0x4, scoped, tag = 'scoped memory for tpu_custom_call.1']
    #allocation5 [shape = 'u8[1024]{0}', space=vmem, size = 0x400, scoped, tag = 'input window, operand 1, single buffered']
    #allocation6 [shape = 's32[1]{0}', space=sflag, size = 0x4, scoped, tag = 'scoped memory for tpu_custom_call.1']
    #allocation7 [shape = 'u8[2048]{0}', space=vmem, size = 0x800, scoped, tag = 'output window, operand 0, single buffered']
    %7 = vsyncpa [#allocation3], 0
    %8 = vsyncpa [#allocation6], 0
    %9 = vsyncpa [#allocation4], 0
    // Predicated region
    $region2: #{tpu_custom_call.1} parent=1 // pred_check
      _
    $region3: #{tpu_custom_call.1} parent=1 // pred_check_branch
      %11 = sbr.rel (0) target = $region5
    $region4: #{tpu_custom_call.1} parent=1 // pred_region
      %13 = vsyncadd [#allocation3], 0
      %s15 = sshll.u32 %s0, 4
      %s16 = int_to_ptr.hbm [resolvable:$true] %s15
      %s17 = sshll.u32 [#allocation2], 4
      %s18 = int_to_ptr.vmem [resolvable:$true] %s17
      %20 = dma.hbm_to_vmem [thread:$0]  %s16, 64, %s18, [#allocation3]
    $region5: #{tpu_custom_call.1} parent=1 // pred_fallthru
      _
    // Predicated region
    $region6: #{tpu_custom_call.1} parent=1 // pred_check
      _
    $region7: #{tpu_custom_call.1} parent=1 // pred_check_branch
      %22 = sbr.rel (0) target = $region9
    $region8: #{tpu_custom_call.1} parent=1 // pred_region
      %24 = vsyncadd [#allocation6], 0
      %s26 = sshll.u32 %s1, 4
      %s27 = int_to_ptr.hbm [resolvable:$true] %s26
      %s28 = sshll.u32 [#allocation5], 4
      %s29 = int_to_ptr.vmem [resolvable:$true] %s28
      %31 = dma.hbm_to_vmem [thread:$0]  %s27, 32, %s29, [#allocation6]
    $region9: #{tpu_custom_call.1} parent=1 // pred_fallthru
      _
    // Predicated region
    $region10: #{tpu_custom_call.1} parent=1 // pred_check
      _
    $region11: #{tpu_custom_call.1} parent=1 // pred_check_branch
      %33 = sbr.rel (0) target = $region13
    $region12: #{tpu_custom_call.1} parent=1 // pred_region
      %35 = dma.done [#allocation3], 64
    $region13: #{tpu_custom_call.1} parent=1 // pred_fallthru
      _
    // Predicated region
    $region14: #{tpu_custom_call.1} parent=1 // pred_check
      _
    $region15: #{tpu_custom_call.1} parent=1 // pred_check_branch
      %37 = sbr.rel (0) target = $region17
    $region16: #{tpu_custom_call.1} parent=1 // pred_region
      %39 = dma.done [#allocation6], 32
    $region17: #{tpu_custom_call.1} parent=1 // pred_fallthru
      _
    %v40 = vld [vmem:[#allocation2] sm:$0xf]
    %v41 = vld [vmem:[#allocation5] sm:$0x3]
    %v43 = vperm.slane %v41, 0
    %v44 = vperm.slane %v41, 1
    %v45 = vrot.slane %v44, 6
    %vm46 = vcmask 1041408
    %v47 = vsel %vm46, %v43, %v45
    %v49 = vadd.f32 %v40, %v47
    %50 = vst [vmem:[#allocation7] sm:$0xf] %v49
    // Predicated region
    $region18: #{tpu_custom_call.1} parent=1 // pred_check
      _
    $region19: #{tpu_custom_call.1} parent=1 // pred_check_branch
      %52 = sbr.rel (0) target = $region21
    $region20: #{tpu_custom_call.1} parent=1 // pred_region
      %54 = vsyncadd [#allocation4], 0
      %s56 = sshll.u32 [#allocation7], 4
      %s57 = int_to_ptr.vmem [resolvable:$true] %s56
      %s58 = sshll.u32 %s2, 4
      %s59 = int_to_ptr.hbm [resolvable:$true] %s58
      %61 = dma.vmem_to_hbm [thread:$0]  %s57, 64, %s59, [#allocation4]
    $region21: #{tpu_custom_call.1} parent=1 // pred_fallthru
      _
    // Predicated region
    $region22: #{tpu_custom_call.1} parent=1 // pred_check
      _
    $region23: #{tpu_custom_call.1} parent=1 // pred_check_branch
      %63 = sbr.rel (0) target = $region25
    $region24: #{tpu_custom_call.1} parent=1 // pred_region
      %65 = dma.done [#allocation4], 64
    $region25: #{tpu_custom_call.1} parent=1 // pred_fallthru
      _
    %66 = vsyncpa [#allocation3], 1
    %67 = vsyncpa [#allocation6], 1
    %68 = vsyncpa [#allocation4], 1

</llo_original>
